<compile_context>
chip_gen: v6e
topology: v6e:2x2x1
jax: 0.10.0
libtpu: 0.0.40
codegen_flags: <defaults>
</compile_context>

<pallas_src>
import jax
import jax.numpy as jnp
from jax.experimental import pallas as pl
from jax.experimental.pallas import tpu as pltpu

EPS = 1e-5
LAYER_SIZES = [(4, 8), (8, 8), (8, 4), (4, 4)]  # (in_features, out_features)
NUM_LAYERS = len(LAYER_SIZES)
PAD = 8  # per-layer lane stride inside the packed parameter slabs


def _linear_relu_bn(h, w, b, gamma, beta):
    """One Linear -> ReLU -> BatchNorm1d (training-mode batch stats) block.

    h:              (B, fi) activations (batch on sublanes, features on lanes)
    w:              (fi, fo) weight, already transposed to (in, out)
    b, gamma, beta: (1, fo)
    """
    B = h.shape[0]
    fi, fo = w.shape

    # Linear: K, N <= 8 -> unrolled VPU broadcast-FMAs; skip the MXU.
    z = jnp.broadcast_to(b, (B, fo))
    for k in range(fi):
        z = z + h[:, k:k + 1] * w[k:k + 1, :]

    # ReLU (VPU).
    z = jnp.maximum(z, 0.0)

    # BatchNorm1d, training mode: biased batch statistics (centered form for
    # exact fidelity to the PyTorch reference).
    mean = jnp.mean(z, axis=0, keepdims=True)        # (1, fo)
    d = z - mean                                     # (B, fo)
    var = jnp.mean(d * d, axis=0, keepdims=True)     # (1, fo)
    scale = gamma * jax.lax.rsqrt(var + EPS)         # (1, fo)  (single EUP rsqrt)
    return d * scale + beta                          # 2 row-broadcasts total


def mlp_kernel(x_ref, w_ref, v_ref, o_ref):
    # w_slab: (8, PAD*NUM_LAYERS). Layer l weight lives at [:fi, PAD*l : PAD*l+fo].
    # v_slab: (3, PAD*NUM_LAYERS). Row 0 = bias, row 1 = gamma, row 2 = beta.
    w_slab = w_ref[...]
    v_slab = v_ref[...]
    h = x_ref[...]
    for l, (fi, fo) in enumerate(LAYER_SIZES):
        c0 = PAD * l
        w = w_slab[:fi, c0:c0 + fo]
        b = v_slab[0:1, c0:c0 + fo]
        g = v_slab[1:2, c0:c0 + fo]
        be = v_slab[2:3, c0:c0 + fo]
        h = _linear_relu_bn(h, w, b, g, be)
    # torch.flatten(x, 1) is a no-op for a (B, F) tensor.
    o_ref[...] = h


def init_params(key):
    """Deterministic params mimicking PyTorch default Linear/BatchNorm1d init."""
    params = []
    for (fan_in, fan_out) in LAYER_SIZES:
        key, kw, kb = jax.random.split(key, 3)
        bound = 1.0 / jnp.sqrt(fan_in)
        # PyTorch stores Linear weight as (out, in); we keep (in, out) = W.T
        w_t = jax.random.uniform(kw, (fan_in, fan_out), jnp.float32, -bound, bound)
        b = jax.random.uniform(kb, (1, fan_out), jnp.float32, -bound, bound)
        gamma = jnp.ones((1, fan_out), jnp.float32)   # BN weight init = 1
        beta = jnp.zeros((1, fan_out), jnp.float32)   # BN bias init = 0
        params.extend([w_t, b, gamma, beta])
    return params


def pack_params(params):
    """Pack the 16 parameter tensors into two DMA-friendly slabs (done once)."""
    w_slab = jnp.zeros((8, PAD * NUM_LAYERS), jnp.float32)
    v_slab = jnp.zeros((3, PAD * NUM_LAYERS), jnp.float32)
    for l, (fi, fo) in enumerate(LAYER_SIZES):
        w, b, g, be = params[4 * l: 4 * l + 4]
        c0 = PAD * l
        w_slab = w_slab.at[:fi, c0:c0 + fo].set(w)
        v_slab = v_slab.at[0, c0:c0 + fo].set(b[0])
        v_slab = v_slab.at[1, c0:c0 + fo].set(g[0])
        v_slab = v_slab.at[2, c0:c0 + fo].set(be[0])
    return w_slab, v_slab


def mlp_forward(x, w_slab, v_slab):
    B = x.shape[0]
    out_features = LAYER_SIZES[-1][1]
    flops = int(sum(2 * B * fi * fo + 10 * B * fo for fi, fo in LAYER_SIZES))
    transcendentals = int(sum(fo for _, fo in LAYER_SIZES))  # one rsqrt per BN feature
    bytes_accessed = int(4 * (x.size + w_slab.size + v_slab.size + B * out_features))
    vmem = pltpu.MemorySpace.VMEM
    return pl.pallas_call(
        mlp_kernel,
        out_shape=jax.ShapeDtypeStruct((B, out_features), jnp.float32),
        # No grid: the whole (tiny) problem fits in VMEM in one shot.
        in_specs=[
            pl.BlockSpec(memory_space=vmem),   # x
            pl.BlockSpec(memory_space=vmem),   # packed weights
            pl.BlockSpec(memory_space=vmem),   # packed bias/gamma/beta
        ],
        out_specs=pl.BlockSpec(memory_space=vmem),
        cost_estimate=pl.CostEstimate(
            flops=flops,
            transcendentals=transcendentals,
            bytes_accessed=bytes_accessed,
        ),
    )(x, w_slab, v_slab)


def mlp_reference(x, params):
    h = x
    for i in range(NUM_LAYERS):
        w, b, g, be = params[4 * i: 4 * i + 4]
        h = jnp.maximum(h @ w + b, 0.0)
        mean = jnp.mean(h, axis=0, keepdims=True)
        var = jnp.mean((h - mean) ** 2, axis=0, keepdims=True)
        h = (h - mean) * jax.lax.rsqrt(var + EPS) * g + be
    return h


if __name__ == "__main__":
    key = jax.random.PRNGKey(0)
    key, kx = jax.random.split(key)
    B, F_IN = 8, 4
    x = jax.random.normal(kx, (B, F_IN), jnp.float32)

    params = init_params(key)
    w_slab, v_slab = pack_params(params)

    out = mlp_forward(x, w_slab, v_slab)
    out = jax.block_until_ready(out)

    ref = mlp_reference(x, params)
    assert out.shape == (B, 4), out.shape
    assert jnp.allclose(out, ref, atol=1e-5, rtol=1e-5), \
        f"max err {jnp.max(jnp.abs(out - ref))}"
    print("KERNEL_OK")
</pallas_src>

<mosaic_0001>
module attributes {stable_mosaic.version = 11 : i64} {
  func.func @mlp_kernel(%arg0: memref<8x4xf32, #tpu.memory_space<vmem>>, %arg1: memref<8x32xf32, #tpu.memory_space<vmem>>, %arg2: memref<3x32xf32, #tpu.memory_space<vmem>>, %arg3: memref<8x4xf32, #tpu.memory_space<vmem>>) attributes {dimension_semantics = [], scalar_prefetch = 0 : i64, scratch_operands = 0 : i64, tpu.core_type = #tpu.core_type<tc>} {
    %c0 = arith.constant 0 : index
    %c0_0 = arith.constant 0 : index
    %0 = vector.load %arg1[%c0, %c0_0] : memref<8x32xf32, #tpu.memory_space<vmem>>, vector<8x32xf32>
    %c0_1 = arith.constant 0 : index
    %c0_2 = arith.constant 0 : index
    %1 = vector.load %arg2[%c0_1, %c0_2] : memref<3x32xf32, #tpu.memory_space<vmem>>, vector<3x32xf32>
    %c0_3 = arith.constant 0 : index
    %c0_4 = arith.constant 0 : index
    %2 = vector.load %arg0[%c0_3, %c0_4] : memref<8x4xf32, #tpu.memory_space<vmem>>, vector<8x4xf32>
    %3 = vector.extract_strided_slice %0 {offsets = [0, 0], sizes = [4, 8], strides = [1, 1]} : vector<8x32xf32> to vector<4x8xf32>
    %4 = vector.extract_strided_slice %1 {offsets = [0, 0], sizes = [1, 8], strides = [1, 1]} : vector<3x32xf32> to vector<1x8xf32>
    %5 = vector.extract_strided_slice %1 {offsets = [1, 0], sizes = [1, 8], strides = [1, 1]} : vector<3x32xf32> to vector<1x8xf32>
    %6 = vector.extract_strided_slice %1 {offsets = [2, 0], sizes = [1, 8], strides = [1, 1]} : vector<3x32xf32> to vector<1x8xf32>
    %7 = vector.shape_cast %4 : vector<1x8xf32> to vector<1x8xf32>
    %8 = vector.broadcast %7 : vector<1x8xf32> to vector<8x8xf32>
    %9 = vector.extract_strided_slice %2 {offsets = [0, 0], sizes = [8, 1], strides = [1, 1]} : vector<8x4xf32> to vector<8x1xf32>
    %10 = vector.extract_strided_slice %3 {offsets = [0, 0], sizes = [1, 8], strides = [1, 1]} : vector<4x8xf32> to vector<1x8xf32>
    %11 = vector.broadcast %9 : vector<8x1xf32> to vector<8x8xf32>
    %12 = vector.broadcast %10 : vector<1x8xf32> to vector<8x8xf32>
    %13 = arith.mulf %11, %12 : vector<8x8xf32>
    %14 = arith.addf %8, %13 : vector<8x8xf32>
    %15 = vector.extract_strided_slice %2 {offsets = [0, 1], sizes = [8, 1], strides = [1, 1]} : vector<8x4xf32> to vector<8x1xf32>
    %16 = vector.extract_strided_slice %3 {offsets = [1, 0], sizes = [1, 8], strides = [1, 1]} : vector<4x8xf32> to vector<1x8xf32>
    %17 = vector.broadcast %15 : vector<8x1xf32> to vector<8x8xf32>
    %18 = vector.broadcast %16 : vector<1x8xf32> to vector<8x8xf32>
    %19 = arith.mulf %17, %18 : vector<8x8xf32>
    %20 = arith.addf %14, %19 : vector<8x8xf32>
    %21 = vector.extract_strided_slice %2 {offsets = [0, 2], sizes = [8, 1], strides = [1, 1]} : vector<8x4xf32> to vector<8x1xf32>
    %22 = vector.extract_strided_slice %3 {offsets = [2, 0], sizes = [1, 8], strides = [1, 1]} : vector<4x8xf32> to vector<1x8xf32>
    %23 = vector.broadcast %21 : vector<8x1xf32> to vector<8x8xf32>
    %24 = vector.broadcast %22 : vector<1x8xf32> to vector<8x8xf32>
    %25 = arith.mulf %23, %24 : vector<8x8xf32>
    %26 = arith.addf %20, %25 : vector<8x8xf32>
    %27 = vector.extract_strided_slice %2 {offsets = [0, 3], sizes = [8, 1], strides = [1, 1]} : vector<8x4xf32> to vector<8x1xf32>
    %28 = vector.extract_strided_slice %3 {offsets = [3, 0], sizes = [1, 8], strides = [1, 1]} : vector<4x8xf32> to vector<1x8xf32>
    %29 = vector.broadcast %27 : vector<8x1xf32> to vector<8x8xf32>
    %30 = vector.broadcast %28 : vector<1x8xf32> to vector<8x8xf32>
    %31 = arith.mulf %29, %30 : vector<8x8xf32>
    %32 = arith.addf %26, %31 : vector<8x8xf32>
    %cst = arith.constant 0.000000e+00 : f32
    %33 = vector.broadcast %cst : f32 to vector<8x8xf32>
    %34 = arith.maximumf %32, %33 : vector<8x8xf32>
    %cst_5 = arith.constant dense<0.000000e+00> : vector<8xf32>
    %35 = vector.multi_reduction <add>, %34, %cst_5 [0] : vector<8x8xf32> to vector<8xf32>
    %36 = vector.shape_cast %35 : vector<8xf32> to vector<1x8xf32>
    %cst_6 = arith.constant 8.000000e+00 : f32
    %37 = vector.broadcast %cst_6 : f32 to vector<1x8xf32>
    %38 = arith.divf %36, %37 : vector<1x8xf32>
    %39 = vector.broadcast %38 : vector<1x8xf32> to vector<8x8xf32>
    %40 = arith.subf %34, %39 : vector<8x8xf32>
    %41 = arith.mulf %40, %40 : vector<8x8xf32>
    %cst_7 = arith.constant dense<0.000000e+00> : vector<8xf32>
    %42 = vector.multi_reduction <add>, %41, %cst_7 [0] : vector<8x8xf32> to vector<8xf32>
    %43 = vector.shape_cast %42 : vector<8xf32> to vector<1x8xf32>
    %cst_8 = arith.constant 8.000000e+00 : f32
    %44 = vector.broadcast %cst_8 : f32 to vector<1x8xf32>
    %45 = arith.divf %43, %44 : vector<1x8xf32>
    %cst_9 = arith.constant 9.99999974E-6 : f32
    %46 = vector.broadcast %cst_9 : f32 to vector<1x8xf32>
    %47 = arith.addf %45, %46 : vector<1x8xf32>
    %48 = math.rsqrt %47 : vector<1x8xf32>
    %49 = arith.mulf %5, %48 : vector<1x8xf32>
    %50 = vector.broadcast %49 : vector<1x8xf32> to vector<8x8xf32>
    %51 = arith.mulf %40, %50 : vector<8x8xf32>
    %52 = vector.broadcast %6 : vector<1x8xf32> to vector<8x8xf32>
    %53 = arith.addf %51, %52 : vector<8x8xf32>
    %54 = vector.extract_strided_slice %0 {offsets = [0, 8], sizes = [8, 8], strides = [1, 1]} : vector<8x32xf32> to vector<8x8xf32>
    %55 = vector.extract_strided_slice %1 {offsets = [0, 8], sizes = [1, 8], strides = [1, 1]} : vector<3x32xf32> to vector<1x8xf32>
    %56 = vector.extract_strided_slice %1 {offsets = [1, 8], sizes = [1, 8], strides = [1, 1]} : vector<3x32xf32> to vector<1x8xf32>
    %57 = vector.extract_strided_slice %1 {offsets = [2, 8], sizes = [1, 8], strides = [1, 1]} : vector<3x32xf32> to vector<1x8xf32>
    %58 = vector.shape_cast %55 : vector<1x8xf32> to vector<1x8xf32>
    %59 = vector.broadcast %58 : vector<1x8xf32> to vector<8x8xf32>
    %60 = vector.extract_strided_slice %53 {offsets = [0, 0], sizes = [8, 1], strides = [1, 1]} : vector<8x8xf32> to vector<8x1xf32>
    %61 = vector.extract_strided_slice %54 {offsets = [0, 0], sizes = [1, 8], strides = [1, 1]} : vector<8x8xf32> to vector<1x8xf32>
    %62 = vector.broadcast %60 : vector<8x1xf32> to vector<8x8xf32>
    %63 = vector.broadcast %61 : vector<1x8xf32> to vector<8x8xf32>
    %64 = arith.mulf %62, %63 : vector<8x8xf32>
    %65 = arith.addf %59, %64 : vector<8x8xf32>
    %66 = vector.extract_strided_slice %53 {offsets = [0, 1], sizes = [8, 1], strides = [1, 1]} : vector<8x8xf32> to vector<8x1xf32>
    %67 = vector.extract_strided_slice %54 {offsets = [1, 0], sizes = [1, 8], strides = [1, 1]} : vector<8x8xf32> to vector<1x8xf32>
    %68 = vector.broadcast %66 : vector<8x1xf32> to vector<8x8xf32>
    %69 = vector.broadcast %67 : vector<1x8xf32> to vector<8x8xf32>
    %70 = arith.mulf %68, %69 : vector<8x8xf32>
    %71 = arith.addf %65, %70 : vector<8x8xf32>
    %72 = vector.extract_strided_slice %53 {offsets = [0, 2], sizes = [8, 1], strides = [1, 1]} : vector<8x8xf32> to vector<8x1xf32>
    %73 = vector.extract_strided_slice %54 {offsets = [2, 0], sizes = [1, 8], strides = [1, 1]} : vector<8x8xf32> to vector<1x8xf32>
    %74 = vector.broadcast %72 : vector<8x1xf32> to vector<8x8xf32>
    %75 = vector.broadcast %73 : vector<1x8xf32> to vector<8x8xf32>
    %76 = arith.mulf %74, %75 : vector<8x8xf32>
    %77 = arith.addf %71, %76 : vector<8x8xf32>
    %78 = vector.extract_strided_slice %53 {offsets = [0, 3], sizes = [8, 1], strides = [1, 1]} : vector<8x8xf32> to vector<8x1xf32>
    %79 = vector.extract_strided_slice %54 {offsets = [3, 0], sizes = [1, 8], strides = [1, 1]} : vector<8x8xf32> to vector<1x8xf32>
    %80 = vector.broadcast %78 : vector<8x1xf32> to vector<8x8xf32>
    %81 = vector.broadcast %79 : vector<1x8xf32> to vector<8x8xf32>
    %82 = arith.mulf %80, %81 : vector<8x8xf32>
    %83 = arith.addf %77, %82 : vector<8x8xf32>
    %84 = vector.extract_strided_slice %53 {offsets = [0, 4], sizes = [8, 1], strides = [1, 1]} : vector<8x8xf32> to vector<8x1xf32>
    %85 = vector.extract_strided_slice %54 {offsets = [4, 0], sizes = [1, 8], strides = [1, 1]} : vector<8x8xf32> to vector<1x8xf32>
    %86 = vector.broadcast %84 : vector<8x1xf32> to vector<8x8xf32>
    %87 = vector.broadcast %85 : vector<1x8xf32> to vector<8x8xf32>
    %88 = arith.mulf %86, %87 : vector<8x8xf32>
    %89 = arith.addf %83, %88 : vector<8x8xf32>
    %90 = vector.extract_strided_slice %53 {offsets = [0, 5], sizes = [8, 1], strides = [1, 1]} : vector<8x8xf32> to vector<8x1xf32>
    %91 = vector.extract_strided_slice %54 {offsets = [5, 0], sizes = [1, 8], strides = [1, 1]} : vector<8x8xf32> to vector<1x8xf32>
    %92 = vector.broadcast %90 : vector<8x1xf32> to vector<8x8xf32>
    %93 = vector.broadcast %91 : vector<1x8xf32> to vector<8x8xf32>
    %94 = arith.mulf %92, %93 : vector<8x8xf32>
    %95 = arith.addf %89, %94 : vector<8x8xf32>
    %96 = vector.extract_strided_slice %53 {offsets = [0, 6], sizes = [8, 1], strides = [1, 1]} : vector<8x8xf32> to vector<8x1xf32>
    %97 = vector.extract_strided_slice %54 {offsets = [6, 0], sizes = [1, 8], strides = [1, 1]} : vector<8x8xf32> to vector<1x8xf32>
    %98 = vector.broadcast %96 : vector<8x1xf32> to vector<8x8xf32>
    %99 = vector.broadcast %97 : vector<1x8xf32> to vector<8x8xf32>
    %100 = arith.mulf %98, %99 : vector<8x8xf32>
    %101 = arith.addf %95, %100 : vector<8x8xf32>
    %102 = vector.extract_strided_slice %53 {offsets = [0, 7], sizes = [8, 1], strides = [1, 1]} : vector<8x8xf32> to vector<8x1xf32>
    %103 = vector.extract_strided_slice %54 {offsets = [7, 0], sizes = [1, 8], strides = [1, 1]} : vector<8x8xf32> to vector<1x8xf32>
    %104 = vector.broadcast %102 : vector<8x1xf32> to vector<8x8xf32>
    %105 = vector.broadcast %103 : vector<1x8xf32> to vector<8x8xf32>
    %106 = arith.mulf %104, %105 : vector<8x8xf32>
    %107 = arith.addf %101, %106 : vector<8x8xf32>
    %cst_10 = arith.constant 0.000000e+00 : f32
    %108 = vector.broadcast %cst_10 : f32 to vector<8x8xf32>
    %109 = arith.maximumf %107, %108 : vector<8x8xf32>
    %cst_11 = arith.constant dense<0.000000e+00> : vector<8xf32>
    %110 = vector.multi_reduction <add>, %109, %cst_11 [0] : vector<8x8xf32> to vector<8xf32>
    %111 = vector.shape_cast %110 : vector<8xf32> to vector<1x8xf32>
    %cst_12 = arith.constant 8.000000e+00 : f32
    %112 = vector.broadcast %cst_12 : f32 to vector<1x8xf32>
    %113 = arith.divf %111, %112 : vector<1x8xf32>
    %114 = vector.broadcast %113 : vector<1x8xf32> to vector<8x8xf32>
    %115 = arith.subf %109, %114 : vector<8x8xf32>
    %116 = arith.mulf %115, %115 : vector<8x8xf32>
    %cst_13 = arith.constant dense<0.000000e+00> : vector<8xf32>
    %117 = vector.multi_reduction <add>, %116, %cst_13 [0] : vector<8x8xf32> to vector<8xf32>
    %118 = vector.shape_cast %117 : vector<8xf32> to vector<1x8xf32>
    %cst_14 = arith.constant 8.000000e+00 : f32
    %119 = vector.broadcast %cst_14 : f32 to vector<1x8xf32>
    %120 = arith.divf %118, %119 : vector<1x8xf32>
    %cst_15 = arith.constant 9.99999974E-6 : f32
    %121 = vector.broadcast %cst_15 : f32 to vector<1x8xf32>
    %122 = arith.addf %120, %121 : vector<1x8xf32>
    %123 = math.rsqrt %122 : vector<1x8xf32>
    %124 = arith.mulf %56, %123 : vector<1x8xf32>
    %125 = vector.broadcast %124 : vector<1x8xf32> to vector<8x8xf32>
    %126 = arith.mulf %115, %125 : vector<8x8xf32>
    %127 = vector.broadcast %57 : vector<1x8xf32> to vector<8x8xf32>
    %128 = arith.addf %126, %127 : vector<8x8xf32>
    %129 = vector.extract_strided_slice %0 {offsets = [0, 16], sizes = [8, 4], strides = [1, 1]} : vector<8x32xf32> to vector<8x4xf32>
    %130 = vector.extract_strided_slice %1 {offsets = [0, 16], sizes = [1, 4], strides = [1, 1]} : vector<3x32xf32> to vector<1x4xf32>
    %131 = vector.extract_strided_slice %1 {offsets = [1, 16], sizes = [1, 4], strides = [1, 1]} : vector<3x32xf32> to vector<1x4xf32>
    %132 = vector.extract_strided_slice %1 {offsets = [2, 16], sizes = [1, 4], strides = [1, 1]} : vector<3x32xf32> to vector<1x4xf32>
    %133 = vector.shape_cast %130 : vector<1x4xf32> to vector<1x4xf32>
    %134 = vector.broadcast %133 : vector<1x4xf32> to vector<8x4xf32>
    %135 = vector.extract_strided_slice %128 {offsets = [0, 0], sizes = [8, 1], strides = [1, 1]} : vector<8x8xf32> to vector<8x1xf32>
    %136 = vector.extract_strided_slice %129 {offsets = [0, 0], sizes = [1, 4], strides = [1, 1]} : vector<8x4xf32> to vector<1x4xf32>
    %137 = vector.broadcast %135 : vector<8x1xf32> to vector<8x4xf32>
    %138 = vector.broadcast %136 : vector<1x4xf32> to vector<8x4xf32>
    %139 = arith.mulf %137, %138 : vector<8x4xf32>
    %140 = arith.addf %134, %139 : vector<8x4xf32>
    %141 = vector.extract_strided_slice %128 {offsets = [0, 1], sizes = [8, 1], strides = [1, 1]} : vector<8x8xf32> to vector<8x1xf32>
    %142 = vector.extract_strided_slice %129 {offsets = [1, 0], sizes = [1, 4], strides = [1, 1]} : vector<8x4xf32> to vector<1x4xf32>
    %143 = vector.broadcast %141 : vector<8x1xf32> to vector<8x4xf32>
    %144 = vector.broadcast %142 : vector<1x4xf32> to vector<8x4xf32>
    %145 = arith.mulf %143, %144 : vector<8x4xf32>
    %146 = arith.addf %140, %145 : vector<8x4xf32>
    %147 = vector.extract_strided_slice %128 {offsets = [0, 2], sizes = [8, 1], strides = [1, 1]} : vector<8x8xf32> to vector<8x1xf32>
    %148 = vector.extract_strided_slice %129 {offsets = [2, 0], sizes = [1, 4], strides = [1, 1]} : vector<8x4xf32> to vector<1x4xf32>
    %149 = vector.broadcast %147 : vector<8x1xf32> to vector<8x4xf32>
    %150 = vector.broadcast %148 : vector<1x4xf32> to vector<8x4xf32>
    %151 = arith.mulf %149, %150 : vector<8x4xf32>
    %152 = arith.addf %146, %151 : vector<8x4xf32>
    %153 = vector.extract_strided_slice %128 {offsets = [0, 3], sizes = [8, 1], strides = [1, 1]} : vector<8x8xf32> to vector<8x1xf32>
    %154 = vector.extract_strided_slice %129 {offsets = [3, 0], sizes = [1, 4], strides = [1, 1]} : vector<8x4xf32> to vector<1x4xf32>
    %155 = vector.broadcast %153 : vector<8x1xf32> to vector<8x4xf32>
    %156 = vector.broadcast %154 : vector<1x4xf32> to vector<8x4xf32>
    %157 = arith.mulf %155, %156 : vector<8x4xf32>
    %158 = arith.addf %152, %157 : vector<8x4xf32>
    %159 = vector.extract_strided_slice %128 {offsets = [0, 4], sizes = [8, 1], strides = [1, 1]} : vector<8x8xf32> to vector<8x1xf32>
    %160 = vector.extract_strided_slice %129 {offsets = [4, 0], sizes = [1, 4], strides = [1, 1]} : vector<8x4xf32> to vector<1x4xf32>
    %161 = vector.broadcast %159 : vector<8x1xf32> to vector<8x4xf32>
    %162 = vector.broadcast %160 : vector<1x4xf32> to vector<8x4xf32>
    %163 = arith.mulf %161, %162 : vector<8x4xf32>
    %164 = arith.addf %158, %163 : vector<8x4xf32>
    %165 = vector.extract_strided_slice %128 {offsets = [0, 5], sizes = [8, 1], strides = [1, 1]} : vector<8x8xf32> to vector<8x1xf32>
    %166 = vector.extract_strided_slice %129 {offsets = [5, 0], sizes = [1, 4], strides = [1, 1]} : vector<8x4xf32> to vector<1x4xf32>
    %167 = vector.broadcast %165 : vector<8x1xf32> to vector<8x4xf32>
    %168 = vector.broadcast %166 : vector<1x4xf32> to vector<8x4xf32>
    %169 = arith.mulf %167, %168 : vector<8x4xf32>
    %170 = arith.addf %164, %169 : vector<8x4xf32>
    %171 = vector.extract_strided_slice %128 {offsets = [0, 6], sizes = [8, 1], strides = [1, 1]} : vector<8x8xf32> to vector<8x1xf32>
    %172 = vector.extract_strided_slice %129 {offsets = [6, 0], sizes = [1, 4], strides = [1, 1]} : vector<8x4xf32> to vector<1x4xf32>
    %173 = vector.broadcast %171 : vector<8x1xf32> to vector<8x4xf32>
    %174 = vector.broadcast %172 : vector<1x4xf32> to vector<8x4xf32>
    %175 = arith.mulf %173, %174 : vector<8x4xf32>
    %176 = arith.addf %170, %175 : vector<8x4xf32>
    %177 = vector.extract_strided_slice %128 {offsets = [0, 7], sizes = [8, 1], strides = [1, 1]} : vector<8x8xf32> to vector<8x1xf32>
    %178 = vector.extract_strided_slice %129 {offsets = [7, 0], sizes = [1, 4], strides = [1, 1]} : vector<8x4xf32> to vector<1x4xf32>
    %179 = vector.broadcast %177 : vector<8x1xf32> to vector<8x4xf32>
    %180 = vector.broadcast %178 : vector<1x4xf32> to vector<8x4xf32>
    %181 = arith.mulf %179, %180 : vector<8x4xf32>
    %182 = arith.addf %176, %181 : vector<8x4xf32>
    %cst_16 = arith.constant 0.000000e+00 : f32
    %183 = vector.broadcast %cst_16 : f32 to vector<8x4xf32>
    %184 = arith.maximumf %182, %183 : vector<8x4xf32>
    %cst_17 = arith.constant dense<0.000000e+00> : vector<4xf32>
    %185 = vector.multi_reduction <add>, %184, %cst_17 [0] : vector<8x4xf32> to vector<4xf32>
    %186 = vector.shape_cast %185 : vector<4xf32> to vector<1x4xf32>
    %cst_18 = arith.constant 8.000000e+00 : f32
    %187 = vector.broadcast %cst_18 : f32 to vector<1x4xf32>
    %188 = arith.divf %186, %187 : vector<1x4xf32>
    %189 = vector.broadcast %188 : vector<1x4xf32> to vector<8x4xf32>
    %190 = arith.subf %184, %189 : vector<8x4xf32>
    %191 = arith.mulf %190, %190 : vector<8x4xf32>
    %cst_19 = arith.constant dense<0.000000e+00> : vector<4xf32>
    %192 = vector.multi_reduction <add>, %191, %cst_19 [0] : vector<8x4xf32> to vector<4xf32>
    %193 = vector.shape_cast %192 : vector<4xf32> to vector<1x4xf32>
    %cst_20 = arith.constant 8.000000e+00 : f32
    %194 = vector.broadcast %cst_20 : f32 to vector<1x4xf32>
    %195 = arith.divf %193, %194 : vector<1x4xf32>
    %cst_21 = arith.constant 9.99999974E-6 : f32
    %196 = vector.broadcast %cst_21 : f32 to vector<1x4xf32>
    %197 = arith.addf %195, %196 : vector<1x4xf32>
    %198 = math.rsqrt %197 : vector<1x4xf32>
    %199 = arith.mulf %131, %198 : vector<1x4xf32>
    %200 = vector.broadcast %199 : vector<1x4xf32> to vector<8x4xf32>
    %201 = arith.mulf %190, %200 : vector<8x4xf32>
    %202 = vector.broadcast %132 : vector<1x4xf32> to vector<8x4xf32>
    %203 = arith.addf %201, %202 : vector<8x4xf32>
    %204 = vector.extract_strided_slice %0 {offsets = [0, 24], sizes = [4, 4], strides = [1, 1]} : vector<8x32xf32> to vector<4x4xf32>
    %205 = vector.extract_strided_slice %1 {offsets = [0, 24], sizes = [1, 4], strides = [1, 1]} : vector<3x32xf32> to vector<1x4xf32>
    %206 = vector.extract_strided_slice %1 {offsets = [1, 24], sizes = [1, 4], strides = [1, 1]} : vector<3x32xf32> to vector<1x4xf32>
    %207 = vector.extract_strided_slice %1 {offsets = [2, 24], sizes = [1, 4], strides = [1, 1]} : vector<3x32xf32> to vector<1x4xf32>
    %208 = vector.shape_cast %205 : vector<1x4xf32> to vector<1x4xf32>
    %209 = vector.broadcast %208 : vector<1x4xf32> to vector<8x4xf32>
    %210 = vector.extract_strided_slice %203 {offsets = [0, 0], sizes = [8, 1], strides = [1, 1]} : vector<8x4xf32> to vector<8x1xf32>
    %211 = vector.extract_strided_slice %204 {offsets = [0, 0], sizes = [1, 4], strides = [1, 1]} : vector<4x4xf32> to vector<1x4xf32>
    %212 = vector.broadcast %210 : vector<8x1xf32> to vector<8x4xf32>
    %213 = vector.broadcast %211 : vector<1x4xf32> to vector<8x4xf32>
    %214 = arith.mulf %212, %213 : vector<8x4xf32>
    %215 = arith.addf %209, %214 : vector<8x4xf32>
    %216 = vector.extract_strided_slice %203 {offsets = [0, 1], sizes = [8, 1], strides = [1, 1]} : vector<8x4xf32> to vector<8x1xf32>
    %217 = vector.extract_strided_slice %204 {offsets = [1, 0], sizes = [1, 4], strides = [1, 1]} : vector<4x4xf32> to vector<1x4xf32>
    %218 = vector.broadcast %216 : vector<8x1xf32> to vector<8x4xf32>
    %219 = vector.broadcast %217 : vector<1x4xf32> to vector<8x4xf32>
    %220 = arith.mulf %218, %219 : vector<8x4xf32>
    %221 = arith.addf %215, %220 : vector<8x4xf32>
    %222 = vector.extract_strided_slice %203 {offsets = [0, 2], sizes = [8, 1], strides = [1, 1]} : vector<8x4xf32> to vector<8x1xf32>
    %223 = vector.extract_strided_slice %204 {offsets = [2, 0], sizes = [1, 4], strides = [1, 1]} : vector<4x4xf32> to vector<1x4xf32>
    %224 = vector.broadcast %222 : vector<8x1xf32> to vector<8x4xf32>
    %225 = vector.broadcast %223 : vector<1x4xf32> to vector<8x4xf32>
    %226 = arith.mulf %224, %225 : vector<8x4xf32>
    %227 = arith.addf %221, %226 : vector<8x4xf32>
    %228 = vector.extract_strided_slice %203 {offsets = [0, 3], sizes = [8, 1], strides = [1, 1]} : vector<8x4xf32> to vector<8x1xf32>
    %229 = vector.extract_strided_slice %204 {offsets = [3, 0], sizes = [1, 4], strides = [1, 1]} : vector<4x4xf32> to vector<1x4xf32>
    %230 = vector.broadcast %228 : vector<8x1xf32> to vector<8x4xf32>
    %231 = vector.broadcast %229 : vector<1x4xf32> to vector<8x4xf32>
    %232 = arith.mulf %230, %231 : vector<8x4xf32>
    %233 = arith.addf %227, %232 : vector<8x4xf32>
    %cst_22 = arith.constant 0.000000e+00 : f32
    %234 = vector.broadcast %cst_22 : f32 to vector<8x4xf32>
    %235 = arith.maximumf %233, %234 : vector<8x4xf32>
    %cst_23 = arith.constant dense<0.000000e+00> : vector<4xf32>
    %236 = vector.multi_reduction <add>, %235, %cst_23 [0] : vector<8x4xf32> to vector<4xf32>
    %237 = vector.shape_cast %236 : vector<4xf32> to vector<1x4xf32>
    %cst_24 = arith.constant 8.000000e+00 : f32
    %238 = vector.broadcast %cst_24 : f32 to vector<1x4xf32>
    %239 = arith.divf %237, %238 : vector<1x4xf32>
    %240 = vector.broadcast %239 : vector<1x4xf32> to vector<8x4xf32>
    %241 = arith.subf %235, %240 : vector<8x4xf32>
    %242 = arith.mulf %241, %241 : vector<8x4xf32>
    %cst_25 = arith.constant dense<0.000000e+00> : vector<4xf32>
    %243 = vector.multi_reduction <add>, %242, %cst_25 [0] : vector<8x4xf32> to vector<4xf32>
    %244 = vector.shape_cast %243 : vector<4xf32> to vector<1x4xf32>
    %cst_26 = arith.constant 8.000000e+00 : f32
    %245 = vector.broadcast %cst_26 : f32 to vector<1x4xf32>
    %246 = arith.divf %244, %245 : vector<1x4xf32>
    %cst_27 = arith.constant 9.99999974E-6 : f32
    %247 = vector.broadcast %cst_27 : f32 to vector<1x4xf32>
    %248 = arith.addf %246, %247 : vector<1x4xf32>
    %249 = math.rsqrt %248 : vector<1x4xf32>
    %250 = arith.mulf %206, %249 : vector<1x4xf32>
    %251 = vector.broadcast %250 : vector<1x4xf32> to vector<8x4xf32>
    %252 = arith.mulf %241, %251 : vector<8x4xf32>
    %253 = vector.broadcast %207 : vector<1x4xf32> to vector<8x4xf32>
    %254 = arith.addf %252, %253 : vector<8x4xf32>
    %c0_28 = arith.constant 0 : index
    %c0_29 = arith.constant 0 : index
    %255 = vector.load %arg3[%c0_28, %c0_29] : memref<8x4xf32, #tpu.memory_space<vmem>>, vector<8x4xf32>
    tpu.vector_store %arg3[%c0_28, %c0_29], %254 {strides = array<i32>} : memref<8x4xf32, #tpu.memory_space<vmem>>, vector<8x4xf32>,
    return
  }
}

</mosaic_0001>

<llo_original>
// kernel: tpu_custom_call.1
$region0: #{tpu_custom_call.1}
  #allocation0 [shape = 'u32[]', space=smem, size = 0x4, offset = 0x4, fixed_abs, tag = 'smem constant byte address 0x4 - core index']
  #allocation1 [shape = 'u32[144,128]{1,0:T(1,128)}', space=vmem, size = 0x12000, scoped, tag = 'internal scratch']
  %s0 = inlined_call_operand.vmem [shape: f32[8,4], index: 0, kind: input, shape index: {}]
  %s1 = inlined_call_operand.vmem [shape: f32[8,32], index: 1, kind: input, shape index: {}]
  %s2 = inlined_call_operand.vmem [shape: f32[3,32], index: 2, kind: input, shape index: {}]
  %s3 = inlined_call_operand.vmem [shape: f32[8,4], index: 3, kind: output, shape index: {}]
  %s4 = sld [smem:[#allocation0]]
  $region22: #{tpu_custom_call.1} parent=0
    _
  %s6 = ssub.s32 1, %s4
  %s7 = scalar_select 0, %s6, %s4
  // Predicated region
  $region2: #{tpu_custom_call.1} parent=0 // pred_check
    _
  $region3: #{tpu_custom_call.1} parent=0 // pred_check_branch
    %9 = sbr.rel (0) target = $region5
  $region4: #{tpu_custom_call.1} parent=0 // pred_region
    _
  $region5: #{tpu_custom_call.1} parent=0 // pred_fallthru
    _
  // Predicated region
  $region6: #{tpu_custom_call.1} parent=0 // pred_check
    _
  $region7: #{tpu_custom_call.1} parent=0 // pred_check_branch
    %11 = sbr.rel (0) target = $region9
  $region8: #{tpu_custom_call.1} parent=0 // pred_region
    _
  $region9: #{tpu_custom_call.1} parent=0 // pred_fallthru
    _
  // Predicated region
  $region10: #{tpu_custom_call.1} parent=0 // pred_check
    _
  $region11: #{tpu_custom_call.1} parent=0 // pred_check_branch
    %13 = sbr.rel (0) target = $region13
  $region12: #{tpu_custom_call.1} parent=0 // pred_region
    _
  $region13: #{tpu_custom_call.1} parent=0 // pred_fallthru
    _
  %v14 = vld [vmem:[%s1] sm:$0xff]
  %v15 = vld [vmem:[%s2] sm:$0x7]
  %v16 = vld [vmem:[%s0] sm:$0xff]
  %v17 = vlaneseq
  %v18 = vshrl.u32 %v17, 7
  %v19 = vsub.s32 0, %v18
  %v20 = vrot.slane %v15, %v19
  %22 = vset.pattern.permute.xlu0 0
  %23 = vperm.xlu0 %22, %v16
  %v24 = vpop.permute.xlu0 %23
  %v26 = vlaneseq
  %v27 = vshrl.u32 %v26, 7
  %v28 = vsub.s32 0, %v27
  %v29 = vrot.slane %v14, %v28
  %v30 = vmul.f32 %v24, %v29
  %v31 = vadd.f32 %v20, %v30
  %32 = vset.pattern.permute.xlu0 1
  %33 = vperm.xlu0 %32, %v16
  %v34 = vpop.permute.xlu0 %33
  %v36 = vlaneseq
  %v37 = vshrl.u32 %v36, 7
  %v38 = vsub.s32 1, %v37
  %v39 = vrot.slane %v14, %v38
  %v40 = vmul.f32 %v34, %v39
  %v41 = vadd.f32 %v31, %v40
  %42 = vset.pattern.permute.xlu0 2
  %43 = vperm.xlu0 %42, %v16
  %v44 = vpop.permute.xlu0 %43
  %v46 = vlaneseq
  %v47 = vshrl.u32 %v46, 7
  %v48 = vsub.s32 2, %v47
  %v49 = vrot.slane %v14, %v48
  %v50 = vmul.f32 %v44, %v49
  %v51 = vadd.f32 %v41, %v50
  %52 = vset.pattern.permute.xlu0 3
  %53 = vperm.xlu0 %52, %v16
  %v54 = vpop.permute.xlu0 %53
  %v56 = vlaneseq
  %v57 = vshrl.u32 %v56, 7
  %v58 = vsub.s32 3, %v57
  %v59 = vrot.slane %v14, %v58
  %v60 = vmul.f32 %v54, %v59
  %v61 = vadd.f32 %v51, %v60
  %v62 = vmax.f32 %v61, 0.0
  %vm63 = vcmask 64512
  %v64 = vsel %vm63, %v62, 0.0
  %v65 = vrot.slane %v64, 4
  %v66 = vadd.f32 %v64, %v65
  %v67 = vrot.slane %v66, 2
  %v68 = vadd.f32 %v66, %v67
  %v69 = vrot.slane %v68, 1
  %v70 = vadd.f32 %v68, %v69
  %v71 = vrcp.pop 8.0
  %v72 = vmul.f32 %v70, %v71
  %v73 = vsub.f32 %v62, %v72
  %v74 = vmul.f32 %v73, %v73
  %v75 = vsel %vm63, %v74, 0.0
  %v76 = vrot.slane %v75, 4
  %v77 = vadd.f32 %v75, %v76
  %v78 = vrot.slane %v77, 2
  %v79 = vadd.f32 %v77, %v78
  %v80 = vrot.slane %v79, 1
  %v81 = vadd.f32 %v79, %v80
  %v82 = vmul.f32 %v81, %v71
  %v83 = vadd.f32 %v82, 1e-05
  %v84 = vrsqrt.pop %v83
  %v85 = vmul.f32 %v15, %v84
  %v86 = vlaneseq
  %v87 = vshrl.u32 %v86, 7
  %v88 = vsub.s32 1, %v87
  %v89 = vrot.slane %v85, %v88
  %v90 = vmul.f32 %v73, %v89
  %v91 = vlaneseq
  %v92 = vshrl.u32 %v91, 7
  %v93 = vsub.s32 2, %v92
  %v94 = vrot.slane %v15, %v93
  %v95 = vadd.f32 %v90, %v94
  %97 = vset.pattern.permute.xlu0 0
  %98 = vperm.xlu0 %97, %v95
  %v99 = vpop.permute.xlu0 %98
  %v101 = vmul.f32 %v99, %v29
  %v102 = vadd.f32 %v20, %v101
  %103 = vset.pattern.permute.xlu0 1
  %104 = vperm.xlu0 %103, %v95
  %v105 = vpop.permute.xlu0 %104
  %v107 = vmul.f32 %v105, %v39
  %v108 = vadd.f32 %v102, %v107
  %109 = vset.pattern.permute.xlu0 2
  %110 = vperm.xlu0 %109, %v95
  %v111 = vpop.permute.xlu0 %110
  %v113 = vmul.f32 %v111, %v49
  %v114 = vadd.f32 %v108, %v113
  %115 = vset.pattern.permute.xlu0 3
  %116 = vperm.xlu0 %115, %v95
  %v117 = vpop.permute.xlu0 %116
  %v119 = vmul.f32 %v117, %v59
  %v120 = vadd.f32 %v114, %v119
  %121 = vset.pattern.permute.xlu0 4
  %122 = vperm.xlu0 %121, %v95
  %v123 = vpop.permute.xlu0 %122
  %v125 = vlaneseq
  %v126 = vshrl.u32 %v125, 7
  %v127 = vsub.s32 4, %v126
  %v128 = vrot.slane %v14, %v127
  %v129 = vmul.f32 %v123, %v128
  %v130 = vadd.f32 %v120, %v129
  %131 = vset.pattern.permute.xlu0 5
  %132 = vperm.xlu0 %131, %v95
  %v133 = vpop.permute.xlu0 %132
  %v135 = vlaneseq
  %v136 = vshrl.u32 %v135, 7
  %v137 = vsub.s32 5, %v136
  %v138 = vrot.slane %v14, %v137
  %v139 = vmul.f32 %v133, %v138
  %v140 = vadd.f32 %v130, %v139
  %141 = vset.pattern.permute.xlu0 6
  %142 = vperm.xlu0 %141, %v95
  %v143 = vpop.permute.xlu0 %142
  %v145 = vlaneseq
  %v146 = vshrl.u32 %v145, 7
  %v147 = vsub.s32 6, %v146
  %v148 = vrot.slane %v14, %v147
  %v149 = vmul.f32 %v143, %v148
  %v150 = vadd.f32 %v140, %v149
  %151 = vset.pattern.permute.xlu0 7
  %152 = vperm.xlu0 %151, %v95
  %v153 = vpop.permute.xlu0 %152
  %v155 = vlaneseq
  %v156 = vshrl.u32 %v155, 7
  %v157 = vsub.s32 7, %v156
  %v158 = vrot.slane %v14, %v157
  %v159 = vmul.f32 %v153, %v158
  %v160 = vadd.f32 %v150, %v159
  %v161 = vmax.f32 %v160, 0.0
  %vm162 = vcmask 130112
  %v163 = vsel %vm162, %v161, 0.0
  %v164 = vrot.slane %v163, 4
  %v165 = vadd.f32 %v163, %v164
  %v166 = vrot.slane %v165, 2
  %v167 = vadd.f32 %v165, %v166
  %v168 = vrot.slane %v167, 1
  %v169 = vadd.f32 %v167, %v168
  %v170 = vmul.f32 %v169, %v71
  %v171 = vsub.f32 %v161, %v170
  %v172 = vmul.f32 %v171, %v171
  %v173 = vsel %vm162, %v172, 0.0
  %v174 = vrot.slane %v173, 4
  %v175 = vadd.f32 %v173, %v174
  %v176 = vrot.slane %v175, 2
  %v177 = vadd.f32 %v175, %v176
  %v178 = vrot.slane %v177, 1
  %v179 = vadd.f32 %v177, %v178
  %v180 = vmul.f32 %v179, %v71
  %v181 = vadd.f32 %v180, 1e-05
  %v182 = vrsqrt.pop %v181
  %v183 = vmul.f32 %v15, %v182
  %v184 = vlaneseq
  %v185 = vshrl.u32 %v184, 7
  %v186 = vsub.s32 1, %v185
  %v187 = vrot.slane %v183, %v186
  %v188 = vmul.f32 %v171, %v187
  %v189 = vadd.f32 %v188, %v94
  %191 = vset.pattern.permute.xlu0 8
  %192 = vperm.xlu0 %191, %v189
  %v193 = vpop.permute.xlu0 %192
  %v195 = vmul.f32 %v193, %v29
  %v196 = vadd.f32 %v20, %v195
  %197 = vset.pattern.permute.xlu0 9
  %198 = vperm.xlu0 %197, %v189
  %v199 = vpop.permute.xlu0 %198
  %v201 = vmul.f32 %v199, %v39
  %v202 = vadd.f32 %v196, %v201
  %203 = vset.pattern.permute.xlu0 10
  %204 = vperm.xlu0 %203, %v189
  %v205 = vpop.permute.xlu0 %204
  %v207 = vmul.f32 %v205, %v49
  %v208 = vadd.f32 %v202, %v207
  %209 = vset.pattern.permute.xlu0 11
  %210 = vperm.xlu0 %209, %v189
  %v211 = vpop.permute.xlu0 %210
  %v213 = vmul.f32 %v211, %v59
  %v214 = vadd.f32 %v208, %v213
  %215 = vset.pattern.permute.xlu0 12
  %216 = vperm.xlu0 %215, %v189
  %v217 = vpop.permute.xlu0 %216
  %v219 = vmul.f32 %v217, %v128
  %v220 = vadd.f32 %v214, %v219
  %221 = vset.pattern.permute.xlu0 13
  %222 = vperm.xlu0 %221, %v189
  %v223 = vpop.permute.xlu0 %222
  %v225 = vmul.f32 %v223, %v138
  %v226 = vadd.f32 %v220, %v225
  %227 = vset.pattern.permute.xlu0 14
  %228 = vperm.xlu0 %227, %v189
  %v229 = vpop.permute.xlu0 %228
  %v231 = vmul.f32 %v229, %v148
  %v232 = vadd.f32 %v226, %v231
  %233 = vset.pattern.permute.xlu0 15
  %234 = vperm.xlu0 %233, %v189
  %v235 = vpop.permute.xlu0 %234
  %v237 = vmul.f32 %v235, %v158
  %v238 = vadd.f32 %v232, %v237
  %v239 = vmax.f32 %v238, 0.0
  %vm240 = vcmask 162944
  %v241 = vsel %vm240, %v239, 0.0
  %v242 = vrot.slane %v241, 4
  %v243 = vadd.f32 %v241, %v242
  %v244 = vrot.slane %v243, 2
  %v245 = vadd.f32 %v243, %v244
  %v246 = vrot.slane %v245, 1
  %v247 = vadd.f32 %v245, %v246
  %v248 = vmul.f32 %v247, %v71
  %v249 = vsub.f32 %v239, %v248
  %v250 = vmul.f32 %v249, %v249
  %v251 = vsel %vm240, %v250, 0.0
  %v252 = vrot.slane %v251, 4
  %v253 = vadd.f32 %v251, %v252
  %v254 = vrot.slane %v253, 2
  %v255 = vadd.f32 %v253, %v254
  %v256 = vrot.slane %v255, 1
  %v257 = vadd.f32 %v255, %v256
  %v258 = vmul.f32 %v257, %v71
  %v259 = vadd.f32 %v258, 1e-05
  %v260 = vrsqrt.pop %v259
  %v261 = vmul.f32 %v15, %v260
  %v262 = vlaneseq
  %v263 = vshrl.u32 %v262, 7
  %v264 = vsub.s32 1, %v263
  %v265 = vrot.slane %v261, %v264
  %v266 = vmul.f32 %v249, %v265
  %v267 = vadd.f32 %v266, %v94
  %269 = vset.pattern.permute.xlu0 16
  %270 = vperm.xlu0 %269, %v267
  %v271 = vpop.permute.xlu0 %270
  %v273 = vmul.f32 %v271, %v29
  %v274 = vadd.f32 %v20, %v273
  %275 = vset.pattern.permute.xlu0 17
  %276 = vperm.xlu0 %275, %v267
  %v277 = vpop.permute.xlu0 %276
  %v279 = vmul.f32 %v277, %v39
  %v280 = vadd.f32 %v274, %v279
  %281 = vset.pattern.permute.xlu0 18
  %282 = vperm.xlu0 %281, %v267
  %v283 = vpop.permute.xlu0 %282
  %v285 = vmul.f32 %v283, %v49
  %v286 = vadd.f32 %v280, %v285
  %287 = vset.pattern.permute.xlu0 19
  %288 = vperm.xlu0 %287, %v267
  %v289 = vpop.permute.xlu0 %288
  %v291 = vmul.f32 %v289, %v59
  %v292 = vadd.f32 %v286, %v291
  %v293 = vmax.f32 %v292, 0.0
  %vm294 = vcmask 228544
  %v295 = vsel %vm294, %v293, 0.0
  %v296 = vrot.slane %v295, 4
  %v297 = vadd.f32 %v295, %v296
  %v298 = vrot.slane %v297, 2
  %v299 = vadd.f32 %v297, %v298
  %v300 = vrot.slane %v299, 1
  %v301 = vadd.f32 %v299, %v300
  %v302 = vmul.f32 %v301, %v71
  %v303 = vsub.f32 %v293, %v302
  %v304 = vmul.f32 %v303, %v303
  %v305 = vsel %vm294, %v304, 0.0
  %v306 = vrot.slane %v305, 4
  %v307 = vadd.f32 %v305, %v306
  %v308 = vrot.slane %v307, 2
  %v309 = vadd.f32 %v307, %v308
  %v310 = vrot.slane %v309, 1
  %v311 = vadd.f32 %v309, %v310
  %v312 = vmul.f32 %v311, %v71
  %v313 = vadd.f32 %v312, 1e-05
  %v314 = vrsqrt.pop %v313
  %v315 = vmul.f32 %v15, %v314
  %v316 = vlaneseq
  %v317 = vshrl.u32 %v316, 7
  %v318 = vsub.s32 1, %v317
  %v319 = vrot.slane %v315, %v318
  %v320 = vmul.f32 %v303, %v319
  %v321 = vadd.f32 %v320, %v94
  %323 = vrot.lane.b32.xlu0 %v321, 104
  %v324 = vpop.permute.xlu0 %323
  %vm326 = vcmask 31744
  %327 = vst.msk [vmem:[%s3] sm:$0xff] %vm326, %v324
  // Predicated region
  $region14: #{tpu_custom_call.1} parent=0 // pred_check
    _
  $region15: #{tpu_custom_call.1} parent=0 // pred_check_branch
    %329 = sbr.rel (0) target = $region17
  $region16: #{tpu_custom_call.1} parent=0 // pred_region
    _
  $region17: #{tpu_custom_call.1} parent=0 // pred_fallthru
    _
  // Predicated region
  $region18: #{tpu_custom_call.1} parent=0 // pred_check
    _
  $region19: #{tpu_custom_call.1} parent=0 // pred_check_branch
    %331 = sbr.rel (0) target = $region21
  $region20: #{tpu_custom_call.1} parent=0 // pred_region
    _
  $region21: #{tpu_custom_call.1} parent=0 // pred_fallthru
    _

</llo_original>
